<compile_context>
chip_gen: v7x
topology: tpu7x:2x2x1
jax: 0.10.0
libtpu: 0.0.40
codegen_flags: <defaults>
</compile_context>

<pallas_src>
import functools
import math

import jax
import jax.numpy as jnp
import numpy as np
from jax.experimental import pallas as pl
from jax.experimental.pallas import tpu as pltpu

# ----------------------------- config (module hyper-params) -----------------------------
NUM_CLASSES = 8          # small, consistent with the module (default 80)
REG_MAX = 8              # small, consistent with the module (default 16)
STRIDES = (8, 16, 32)
BOX_W, CLS_W, DFL_W = 7.5, 0.5, 1.5
# anchors=None in __init__ -> use_anchors=False (no anchor buffer)

_LANES = 128
_MAX_BLOCK_ROWS = 8192   # ~4 MiB f32 per input block (x2 pipeline buffers) — v7x-safe
# TODO(synk): on v6e/v7x with bf16 activations, feed preds in bf16 and flip the in-kernel
# compute dtype to bf16 (keep the f32 (8,128) accumulator) for another ~2x; kept f32 here
# to preserve the reference numerics for f32 inputs.

# degree-5 Taylor of log(1+exp(-z)) about z=0.5, valid for z=sigmoid(x) in (0,1)
_SP_A0 = 0.474076984
_SP_A1 = -0.377540669
_SP_A2 = 0.117501866
_SP_A3 = -0.009592800
_SP_A4 = -0.004014866
_SP_A5 = 0.000872967


# ----------------------------- Pallas kernel: fused classification BCE ------------------
def _bce_sum_kernel(x_ref, mask_ref, out_ref, *, num_chunks, chunk_rows, n_valid, ragged):
    """Partial sum of BCEWithLogits(sigmoid(x), target=0) over the class-channel lanes of
    one (tr, 128) tile; writes a lane-dense (1, 8, 128) f32 partial (VPU adds only)."""
    lanes = x_ref.shape[-1]
    keep_cls = mask_ref[...] > 0.5                              # (chunk_rows, lanes) bool

    if ragged:
        row_iota = jax.lax.broadcasted_iota(jnp.int32, (chunk_rows, lanes), 0)
        lane_iota = jax.lax.broadcasted_iota(jnp.int32, (chunk_rows, lanes), 1)
        offs = row_iota * lanes + lane_iota
        block_base = pl.program_id(0) * (num_chunks * chunk_rows * lanes)

    def chunk_body(c, acc):
        r0 = pl.multiple_of(c * chunk_rows, chunk_rows)
        x = x_ref[pl.ds(r0, chunk_rows), :].astype(jnp.float32)
        # module: pred_cls = sigmoid(x); BCEWithLogits(pred_cls, 0) = z + log(1 + e^-z)
        z = pl.reciprocal(1.0 + jnp.exp(-x), approx=True)       # sigmoid(x): 2 EUP ops
        u = z - 0.5
        h = _SP_A5                                              # log(1+e^-z): VPU only
        h = _SP_A4 + u * h
        h = _SP_A3 + u * h
        h = _SP_A2 + u * h
        h = _SP_A1 + u * h
        h = _SP_A0 + u * h
        loss = z + h
        keep = keep_cls
        if ragged:
            g = block_base + c * (chunk_rows * lanes) + offs
            keep = jnp.logical_and(keep, g < n_valid)
        loss = jnp.where(keep, loss, 0.0)                       # select: NaN-safe for OOB
        return acc + jnp.sum(loss.reshape(chunk_rows // 8, 8, lanes), axis=0)

    acc = jax.lax.fori_loop(0, num_chunks, chunk_body,
                            jnp.zeros((8, lanes), jnp.float32),
                            unroll=True if num_chunks <= 8 else 4)
    out_ref[...] = acc.reshape(1, 8, lanes)


def _cls_bce_layer_sum(pred_layer):
    """pred_layer: [B, A, D] (any float dtype).  Returns f32 scalar: sum over all B*A*C
    class logits of BCEWithLogits(sigmoid(x), 0).  Streams the full contiguous buffer."""
    B, A, D = pred_layer.shape
    C = NUM_CLASSES
    n = B * A * D

    flat = pred_layer.reshape(n)                                # free contiguous collapse
    if n % _LANES:                                              # rare fallback: single pad
        flat = jnp.pad(flat, (0, (-n) % _LANES))
    rows = flat.shape[0] // _LANES
    x2d = flat.reshape(rows, _LANES)

    period = math.lcm(D, _LANES) // _LANES                      # channel-mask row period
    chunk_rows = math.lcm(8, period)
    k = max(1, min(_MAX_BLOCK_ROWS // chunk_rows, int(pl.cdiv(rows, chunk_rows))))
    tr = k * chunk_rows
    nb = int(pl.cdiv(rows, tr))
    ragged = (nb * tr * _LANES) != n

    # periodic class-channel mask tile — identical for every chunk of every block,
    # fetched once (constant block index), so it adds no steady-state HBM traffic.
    mask_np = ((np.arange(chunk_rows * _LANES) % D) < C).astype(np.float32)
    mask = jnp.asarray(mask_np.reshape(chunk_rows, _LANES))

    kernel = functools.partial(_bce_sum_kernel, num_chunks=k, chunk_rows=chunk_rows,
                               n_valid=n, ragged=ragged)
    tile_bytes = tr * _LANES * jnp.dtype(pred_layer.dtype).itemsize
    vmem_limit = int(min(32 * 1024 * 1024,
                         max(8 * 1024 * 1024, 2 * tile_bytes + 2 * 1024 * 1024)))

    partials = pl.pallas_call(
        kernel,
        out_shape=jax.ShapeDtypeStruct((nb, 8, _LANES), jnp.float32),
        grid=(nb,),
        in_specs=[pl.BlockSpec((tr, _LANES), lambda b: (b, 0)),
                  pl.BlockSpec((chunk_rows, _LANES), lambda b: (0, 0))],
        out_specs=pl.BlockSpec((1, 8, _LANES), lambda b: (b, 0, 0)),
        compiler_params=pltpu.CompilerParams(
            dimension_semantics=("parallel",),
            vmem_limit_bytes=vmem_limit),
    )(x2d, mask)
    return jnp.sum(partials)


# ----------------------------- glue: pairwise CIoU (tiny T x T) --------------------------
def _bbox_ciou(box1, box2):
    """Follows reference bbox_iou(..., CIoU=True). box1 [N,4], box2 [M,4] -> [N,M]."""
    b1_x1, b1_y1, b1_x2, b1_y2 = jnp.split(box1, 4, axis=1)
    b2_x1, b2_y1, b2_x2, b2_y2 = jnp.split(box2, 4, axis=1)
    inter_x1 = jnp.maximum(b1_x1, b2_x1.T)
    inter_y1 = jnp.maximum(b1_y1, b2_y1.T)
    inter_x2 = jnp.minimum(b1_x2, b2_x2.T)
    inter_y2 = jnp.minimum(b1_y2, b2_y2.T)
    inter_area = jnp.maximum(inter_x2 - inter_x1, 0.0) * jnp.maximum(inter_y2 - inter_y1, 0.0)
    b1_area = (b1_x2 - b1_x1) * (b1_y2 - b1_y1)
    b2_area = (b2_x2 - b2_x1) * (b2_y2 - b2_y1)
    union = b1_area + b2_area.T - inter_area
    iou = inter_area / (union + 1e-7)
    c_x1 = jnp.minimum(b1_x1, b2_x1.T)
    c_y1 = jnp.minimum(b1_y1, b2_y1.T)
    c_x2 = jnp.maximum(b1_x2, b2_x2.T)
    c_y2 = jnp.maximum(b1_y2, b2_y2.T)
    b1_cx = (b1_x1 + b1_x2) / 2.0
    b1_cy = (b1_y1 + b1_y2) / 2.0
    b2_cx = (b2_x1 + b2_x2) / 2.0
    b2_cy = (b2_y1 + b2_y2) / 2.0
    center_dist = (b1_cx - b2_cx.T) ** 2 + (b1_cy - b2_cy.T) ** 2
    diag_dist = (c_x2 - c_x1) ** 2 + (c_y2 - c_y1) ** 2
    v = (4.0 / math.pi ** 2) * (
        jnp.arctan((b2_x2 - b2_x1) / (b2_y2 - b2_y1 + 1e-7)).T
        - jnp.arctan((b1_x2 - b1_x1) / (b1_y2 - b1_y1 + 1e-7))
    ) ** 2
    alpha = v / (1.0 - iou + v + 1e-7)   # no_grad in torch; forward value identical
    return iou - (center_dist / (diag_dist + 1e-7) + alpha * v)


# ----------------------------- full YOLOLoss forward -------------------------------------
def _yolo_loss_impl(preds, targets):
    L = len(preds)
    C, R = NUM_CLASSES, REG_MAX
    T = targets.shape[0]
    D = preds[0].shape[-1]

    # hot path: one streaming Pallas launch per detection layer (no stack, no slice copy)
    per_layer_bce = jnp.stack([_cls_bce_layer_sum(p) for p in preds])            # [L]
    denom_cls = jnp.asarray([p.shape[0] * p.shape[1] * C for p in preds], jnp.float32)

    tf32 = targets.astype(jnp.float32)
    layer_f = tf32[:, 0]                                                         # [T]
    layer_idx = jnp.clip(layer_f.astype(jnp.int32), 0, L - 1)
    grid_size = D                                   # mirrors reference: grid_size = pred.shape[2]
    tb_all = tf32[:, 2:6] * grid_size                                            # [T, 4]
    tcls = jnp.clip(tf32[:, 1].astype(jnp.int32), 0, C - 1)
    gc = tb_all[:, :2].astype(jnp.int32)
    anchor_raw = gc[:, 1] * grid_size + gc[:, 0]
    # TODO(synk): out-of-range targets are clamped (silent), whereas PyTorch would raise.

    onehot_l = (layer_f[:, None] == jnp.arange(L, dtype=jnp.float32)[None, :]
                ).astype(jnp.float32)                                            # [T, L]
    cnt = jnp.sum(onehot_l, axis=0)                                              # [L]
    has = cnt > 0
    cnt_safe = jnp.maximum(cnt, 1.0)

    # within-layer row index = reference's `range(len(anchor_indices))` batch indexing
    same = layer_f[:, None] == layer_f[None, :]                                  # [T, T]
    ti = jnp.arange(T)
    ordv = jnp.sum(jnp.logical_and(same, ti[:, None] > ti[None, :]), axis=1).astype(jnp.int32)

    # gather the [T, D] prediction rows (per-layer gather + select; layers may differ in A)
    strides_t = jnp.take(jnp.asarray(STRIDES[:L], jnp.float32), layer_idx)       # [T]
    gathered = jnp.zeros((T, D), jnp.float32)
    for i, p in enumerate(preds):
        Bi, Ai, _ = p.shape
        rows_i = p[jnp.clip(ordv, 0, Bi - 1), jnp.clip(anchor_raw, 0, Ai - 1), :]
        gathered = jnp.where((layer_f == i)[:, None], rows_i.astype(jnp.float32), gathered)

    # ----- classification: dense all-negative kernel sums + sparse positive corrections
    x_pos = jnp.take_along_axis(gathered[:, :C], tcls[:, None], axis=1)[:, 0]    # [T]
    z_pos = jax.nn.sigmoid(x_pos)                   # t=1 removes the `z` term at each positive
    corr = jnp.sum(onehot_l * z_pos[:, None], axis=0)                            # [L]
    cls_loss = jnp.sum(jnp.where(has, (per_layer_bce - corr) / denom_cls, 0.0)).reshape(1)

    # ----- DFL on the gathered targets (T rows; plain-JAX glue, see header)
    tb = tb_all / strides_t[:, None]                # no-anchor branch: target_boxes / stride
    sel = gathered[:, C:].reshape(T, 4, R)
    p_soft = jax.nn.softmax(sel, axis=-1)           # pred_box = softmax(-1)
    # TODO(synk): the reference F.cross_entropy call is shape-inconsistent for reg_max != 4
    # and is applied to already-softmaxed probs; this implements the intended per-bin DFL CE
    # applied (like the reference) to the softmaxed p.
    logp = jax.nn.log_softmax(p_soft, axis=-1)                                   # [T, 4, R]
    tl_i = tb.astype(jnp.int32)                                                  # target.long()
    wl = (tl_i + 1).astype(jnp.float32) - tb
    wr = 1.0 - wl
    iota_r = jnp.arange(R, dtype=jnp.int32)
    ce_l = -jnp.sum(jnp.where(iota_r[None, None, :] == tl_i[..., None], logp, 0.0), axis=-1)
    ce_r = -jnp.sum(jnp.where(iota_r[None, None, :] == (tl_i + 1)[..., None], logp, 0.0), axis=-1)
    dfl_t = jnp.sum(ce_l * wl + ce_r * wr, axis=1)                               # [T]
    dfl_per_layer = jnp.einsum("t,tl->l", dfl_t, onehot_l) / (cnt_safe * 4.0)
    dfl_loss = jnp.sum(jnp.where(has, dfl_per_layer, 0.0)).reshape(1)

    # ----- box loss: dfl_decode + per-layer pairwise CIoU (as the reference does)
    proj = jnp.arange(R, dtype=jnp.float32)         # linspace(0, reg_max-1, reg_max)
    dec = jnp.sum(p_soft * proj, axis=-1)                                        # [T, 4]
    ciou = _bbox_ciou(dec, tb)                                                   # [T, T]
    pair = jnp.where(same, 1.0 - ciou, 0.0)         # zero cross-layer pairs (NaN-safe select)
    box_per_layer = jnp.einsum("sl,st,tl->l", onehot_l, pair, onehot_l) / (cnt_safe * cnt_safe)
    box_loss = jnp.sum(jnp.where(has, box_per_layer, 0.0)).reshape(1)

    box_loss = box_loss / L
    cls_loss = cls_loss / L
    dfl_loss = dfl_loss / L
    total = BOX_W * box_loss + CLS_W * cls_loss + DFL_W * dfl_loss
    return box_loss, cls_loss, dfl_loss, total


_yolo_loss_jit = jax.jit(_yolo_loss_impl)


def yolo_loss(preds, targets):
    if targets.shape[0] == 0:
        z = jnp.zeros((1,), jnp.float32)
        return z * BOX_W, z * CLS_W, z * DFL_W, z + z + z
    return _yolo_loss_jit(tuple(preds), targets)


if __name__ == "__main__":
    key = jax.random.PRNGKey(0)
    B, A = 2, 256
    D = NUM_CLASSES + 4 * REG_MAX                       # 40
    k1, k2, k3 = jax.random.split(key, 3)
    preds = [jax.random.normal(k, (B, A, D), dtype=jnp.float32) for k in (k1, k2, k3)]

    # targets: (layer_idx, class_id, x, y, w, h). x,y kept small so the reference's
    # anchor index (y*grid + x after *grid_size) stays < A and DFL bins stay < reg_max.
    targets = jnp.array(
        [
            [0, 1, 0.05, 0.08, 0.30, 0.40],
            [0, 3, 0.10, 0.02, 0.50, 0.60],
            [1, 0, 0.04, 0.06, 0.20, 0.90],
            [2, 5, 0.09, 0.09, 0.70, 0.30],
        ],
        dtype=jnp.float32,
    )

    box_l, cls_l, dfl_l, total = yolo_loss(preds, targets)
    jax.block_until_ready((box_l, cls_l, dfl_l, total))
    print("KERNEL_OK")
</pallas_src>

<mosaic_0001>
module attributes {stable_mosaic.version = 11 : i64} {
  func.func @_bce_sum_kernel(%arg0: i32, %arg1: memref<160x128xf32, #tpu.memory_space<vmem>>, %arg2: memref<40x128xf32, #tpu.memory_space<vmem>>, %arg3: memref<1x8x128xf32, #tpu.memory_space<vmem>>) attributes {dimension_semantics = [#tpu.dimension_semantics<parallel>], iteration_bounds = array<i64: 1>, scalar_prefetch = 0 : i64, scratch_operands = 0 : i64, tpu.core_type = #tpu.core_type<tc>, window_params = [{transform_indices = @transform_0, window_bounds = array<i64: 160, 128>}, {pipeline_mode = #tpu.pipeline_mode<synchronous>, transform_indices = @transform_1, window_bounds = array<i64: 40, 128>}, {transform_indices = @transform_2, window_bounds = array<i64: 1, 8, 128>}]} {
    %c0 = arith.constant 0 : index
    %c0_0 = arith.constant 0 : index
    %0 = vector.load %arg2[%c0, %c0_0] : memref<40x128xf32, #tpu.memory_space<vmem>>, vector<40x128xf32>
    %cst = arith.constant 5.000000e-01 : f32
    %1 = vector.broadcast %cst : f32 to vector<40x128xf32>
    %2 = arith.cmpf ogt, %0, %1 : vector<40x128xf32>
    %cst_1 = arith.constant 0.000000e+00 : f32
    %3 = vector.broadcast %cst_1 : f32 to vector<8x128xf32>
    %c0_i32 = arith.constant 0 : i32
    %c40_i32 = arith.constant 40 : i32
    %4 = arith.muli %c0_i32, %c40_i32 : i32
    %5 = tpu.assume_multiple %4, 40 : i32
    %6 = arith.index_cast %5 : i32 to index
    %c0_2 = arith.constant 0 : index
    %7 = vector.load %arg1[%6, %c0_2] : memref<160x128xf32, #tpu.memory_space<vmem>>, vector<40x128xf32>
    %cst_3 = arith.constant 0.000000e+00 : f32
    %8 = vector.broadcast %cst_3 : f32 to vector<40x128xf32>
    %9 = arith.subf %8, %7 : vector<40x128xf32>
    %10 = math.exp %9 : vector<40x128xf32>
    %cst_4 = arith.constant 1.000000e+00 : f32
    %11 = vector.broadcast %cst_4 : f32 to vector<40x128xf32>
    %12 = arith.addf %11, %10 : vector<40x128xf32>
    %13 = tpu.reciprocal %12 {approx = true} : vector<40x128xf32> -> vector<40x128xf32>
    %cst_5 = arith.constant 5.000000e-01 : f32
    %14 = vector.broadcast %cst_5 : f32 to vector<40x128xf32>
    %15 = arith.subf %13, %14 : vector<40x128xf32>
    %cst_6 = arith.constant 8.729670e-04 : f32
    %16 = vector.broadcast %cst_6 : f32 to vector<40x128xf32>
    %17 = arith.mulf %15, %16 : vector<40x128xf32>
    %cst_7 = arith.constant -0.00401486596 : f32
    %18 = vector.broadcast %cst_7 : f32 to vector<40x128xf32>
    %19 = arith.addf %18, %17 : vector<40x128xf32>
    %20 = arith.mulf %15, %19 : vector<40x128xf32>
    %cst_8 = arith.constant -9.592800e-03 : f32
    %21 = vector.broadcast %cst_8 : f32 to vector<40x128xf32>
    %22 = arith.addf %21, %20 : vector<40x128xf32>
    %23 = arith.mulf %15, %22 : vector<40x128xf32>
    %cst_9 = arith.constant 0.117501862 : f32
    %24 = vector.broadcast %cst_9 : f32 to vector<40x128xf32>
    %25 = arith.addf %24, %23 : vector<40x128xf32>
    %26 = arith.mulf %15, %25 : vector<40x128xf32>
    %cst_10 = arith.constant -0.377540678 : f32
    %27 = vector.broadcast %cst_10 : f32 to vector<40x128xf32>
    %28 = arith.addf %27, %26 : vector<40x128xf32>
    %29 = arith.mulf %15, %28 : vector<40x128xf32>
    %cst_11 = arith.constant 4.740770e-01 : f32
    %30 = vector.broadcast %cst_11 : f32 to vector<40x128xf32>
    %31 = arith.addf %30, %29 : vector<40x128xf32>
    %32 = arith.addf %13, %31 : vector<40x128xf32>
    %cst_12 = arith.constant 0.000000e+00 : f32
    %33 = vector.broadcast %cst_12 : f32 to vector<40x128xf32>
    %34 = arith.select %2, %32, %33 : vector<40x128xi1>, vector<40x128xf32>
    %35 = vector.shape_cast %34 : vector<40x128xf32> to vector<5x8x128xf32>
    %cst_13 = arith.constant dense<0.000000e+00> : vector<8x128xf32>
    %36 = vector.multi_reduction <add>, %35, %cst_13 [0] : vector<5x8x128xf32> to vector<8x128xf32>
    %37 = arith.addf %3, %36 : vector<8x128xf32>
    %c1_i32 = arith.constant 1 : i32
    %c40_i32_14 = arith.constant 40 : i32
    %38 = arith.muli %c1_i32, %c40_i32_14 : i32
    %39 = tpu.assume_multiple %38, 40 : i32
    %40 = arith.index_cast %39 : i32 to index
    %c0_15 = arith.constant 0 : index
    %41 = vector.load %arg1[%40, %c0_15] : memref<160x128xf32, #tpu.memory_space<vmem>>, vector<40x128xf32>
    %cst_16 = arith.constant 0.000000e+00 : f32
    %42 = vector.broadcast %cst_16 : f32 to vector<40x128xf32>
    %43 = arith.subf %42, %41 : vector<40x128xf32>
    %44 = math.exp %43 : vector<40x128xf32>
    %cst_17 = arith.constant 1.000000e+00 : f32
    %45 = vector.broadcast %cst_17 : f32 to vector<40x128xf32>
    %46 = arith.addf %45, %44 : vector<40x128xf32>
    %47 = tpu.reciprocal %46 {approx = true} : vector<40x128xf32> -> vector<40x128xf32>
    %cst_18 = arith.constant 5.000000e-01 : f32
    %48 = vector.broadcast %cst_18 : f32 to vector<40x128xf32>
    %49 = arith.subf %47, %48 : vector<40x128xf32>
    %cst_19 = arith.constant 8.729670e-04 : f32
    %50 = vector.broadcast %cst_19 : f32 to vector<40x128xf32>
    %51 = arith.mulf %49, %50 : vector<40x128xf32>
    %cst_20 = arith.constant -0.00401486596 : f32
    %52 = vector.broadcast %cst_20 : f32 to vector<40x128xf32>
    %53 = arith.addf %52, %51 : vector<40x128xf32>
    %54 = arith.mulf %49, %53 : vector<40x128xf32>
    %cst_21 = arith.constant -9.592800e-03 : f32
    %55 = vector.broadcast %cst_21 : f32 to vector<40x128xf32>
    %56 = arith.addf %55, %54 : vector<40x128xf32>
    %57 = arith.mulf %49, %56 : vector<40x128xf32>
    %cst_22 = arith.constant 0.117501862 : f32
    %58 = vector.broadcast %cst_22 : f32 to vector<40x128xf32>
    %59 = arith.addf %58, %57 : vector<40x128xf32>
    %60 = arith.mulf %49, %59 : vector<40x128xf32>
    %cst_23 = arith.constant -0.377540678 : f32
    %61 = vector.broadcast %cst_23 : f32 to vector<40x128xf32>
    %62 = arith.addf %61, %60 : vector<40x128xf32>
    %63 = arith.mulf %49, %62 : vector<40x128xf32>
    %cst_24 = arith.constant 4.740770e-01 : f32
    %64 = vector.broadcast %cst_24 : f32 to vector<40x128xf32>
    %65 = arith.addf %64, %63 : vector<40x128xf32>
    %66 = arith.addf %47, %65 : vector<40x128xf32>
    %cst_25 = arith.constant 0.000000e+00 : f32
    %67 = vector.broadcast %cst_25 : f32 to vector<40x128xf32>
    %68 = arith.select %2, %66, %67 : vector<40x128xi1>, vector<40x128xf32>
    %69 = vector.shape_cast %68 : vector<40x128xf32> to vector<5x8x128xf32>
    %cst_26 = arith.constant dense<0.000000e+00> : vector<8x128xf32>
    %70 = vector.multi_reduction <add>, %69, %cst_26 [0] : vector<5x8x128xf32> to vector<8x128xf32>
    %71 = arith.addf %37, %70 : vector<8x128xf32>
    %c2_i32 = arith.constant 2 : i32
    %c40_i32_27 = arith.constant 40 : i32
    %72 = arith.muli %c2_i32, %c40_i32_27 : i32
    %73 = tpu.assume_multiple %72, 40 : i32
    %74 = arith.index_cast %73 : i32 to index
    %c0_28 = arith.constant 0 : index
    %75 = vector.load %arg1[%74, %c0_28] : memref<160x128xf32, #tpu.memory_space<vmem>>, vector<40x128xf32>
    %cst_29 = arith.constant 0.000000e+00 : f32
    %76 = vector.broadcast %cst_29 : f32 to vector<40x128xf32>
    %77 = arith.subf %76, %75 : vector<40x128xf32>
    %78 = math.exp %77 : vector<40x128xf32>
    %cst_30 = arith.constant 1.000000e+00 : f32
    %79 = vector.broadcast %cst_30 : f32 to vector<40x128xf32>
    %80 = arith.addf %79, %78 : vector<40x128xf32>
    %81 = tpu.reciprocal %80 {approx = true} : vector<40x128xf32> -> vector<40x128xf32>
    %cst_31 = arith.constant 5.000000e-01 : f32
    %82 = vector.broadcast %cst_31 : f32 to vector<40x128xf32>
    %83 = arith.subf %81, %82 : vector<40x128xf32>
    %cst_32 = arith.constant 8.729670e-04 : f32
    %84 = vector.broadcast %cst_32 : f32 to vector<40x128xf32>
    %85 = arith.mulf %83, %84 : vector<40x128xf32>
    %cst_33 = arith.constant -0.00401486596 : f32
    %86 = vector.broadcast %cst_33 : f32 to vector<40x128xf32>
    %87 = arith.addf %86, %85 : vector<40x128xf32>
    %88 = arith.mulf %83, %87 : vector<40x128xf32>
    %cst_34 = arith.constant -9.592800e-03 : f32
    %89 = vector.broadcast %cst_34 : f32 to vector<40x128xf32>
    %90 = arith.addf %89, %88 : vector<40x128xf32>
    %91 = arith.mulf %83, %90 : vector<40x128xf32>
    %cst_35 = arith.constant 0.117501862 : f32
    %92 = vector.broadcast %cst_35 : f32 to vector<40x128xf32>
    %93 = arith.addf %92, %91 : vector<40x128xf32>
    %94 = arith.mulf %83, %93 : vector<40x128xf32>
    %cst_36 = arith.constant -0.377540678 : f32
    %95 = vector.broadcast %cst_36 : f32 to vector<40x128xf32>
    %96 = arith.addf %95, %94 : vector<40x128xf32>
    %97 = arith.mulf %83, %96 : vector<40x128xf32>
    %cst_37 = arith.constant 4.740770e-01 : f32
    %98 = vector.broadcast %cst_37 : f32 to vector<40x128xf32>
    %99 = arith.addf %98, %97 : vector<40x128xf32>
    %100 = arith.addf %81, %99 : vector<40x128xf32>
    %cst_38 = arith.constant 0.000000e+00 : f32
    %101 = vector.broadcast %cst_38 : f32 to vector<40x128xf32>
    %102 = arith.select %2, %100, %101 : vector<40x128xi1>, vector<40x128xf32>
    %103 = vector.shape_cast %102 : vector<40x128xf32> to vector<5x8x128xf32>
    %cst_39 = arith.constant dense<0.000000e+00> : vector<8x128xf32>
    %104 = vector.multi_reduction <add>, %103, %cst_39 [0] : vector<5x8x128xf32> to vector<8x128xf32>
    %105 = arith.addf %71, %104 : vector<8x128xf32>
    %c3_i32 = arith.constant 3 : i32
    %c40_i32_40 = arith.constant 40 : i32
    %106 = arith.muli %c3_i32, %c40_i32_40 : i32
    %107 = tpu.assume_multiple %106, 40 : i32
    %108 = arith.index_cast %107 : i32 to index
    %c0_41 = arith.constant 0 : index
    %109 = vector.load %arg1[%108, %c0_41] : memref<160x128xf32, #tpu.memory_space<vmem>>, vector<40x128xf32>
    %cst_42 = arith.constant 0.000000e+00 : f32
    %110 = vector.broadcast %cst_42 : f32 to vector<40x128xf32>
    %111 = arith.subf %110, %109 : vector<40x128xf32>
    %112 = math.exp %111 : vector<40x128xf32>
    %cst_43 = arith.constant 1.000000e+00 : f32
    %113 = vector.broadcast %cst_43 : f32 to vector<40x128xf32>
    %114 = arith.addf %113, %112 : vector<40x128xf32>
    %115 = tpu.reciprocal %114 {approx = true} : vector<40x128xf32> -> vector<40x128xf32>
    %cst_44 = arith.constant 5.000000e-01 : f32
    %116 = vector.broadcast %cst_44 : f32 to vector<40x128xf32>
    %117 = arith.subf %115, %116 : vector<40x128xf32>
    %cst_45 = arith.constant 8.729670e-04 : f32
    %118 = vector.broadcast %cst_45 : f32 to vector<40x128xf32>
    %119 = arith.mulf %117, %118 : vector<40x128xf32>
    %cst_46 = arith.constant -0.00401486596 : f32
    %120 = vector.broadcast %cst_46 : f32 to vector<40x128xf32>
    %121 = arith.addf %120, %119 : vector<40x128xf32>
    %122 = arith.mulf %117, %121 : vector<40x128xf32>
    %cst_47 = arith.constant -9.592800e-03 : f32
    %123 = vector.broadcast %cst_47 : f32 to vector<40x128xf32>
    %124 = arith.addf %123, %122 : vector<40x128xf32>
    %125 = arith.mulf %117, %124 : vector<40x128xf32>
    %cst_48 = arith.constant 0.117501862 : f32
    %126 = vector.broadcast %cst_48 : f32 to vector<40x128xf32>
    %127 = arith.addf %126, %125 : vector<40x128xf32>
    %128 = arith.mulf %117, %127 : vector<40x128xf32>
    %cst_49 = arith.constant -0.377540678 : f32
    %129 = vector.broadcast %cst_49 : f32 to vector<40x128xf32>
    %130 = arith.addf %129, %128 : vector<40x128xf32>
    %131 = arith.mulf %117, %130 : vector<40x128xf32>
    %cst_50 = arith.constant 4.740770e-01 : f32
    %132 = vector.broadcast %cst_50 : f32 to vector<40x128xf32>
    %133 = arith.addf %132, %131 : vector<40x128xf32>
    %134 = arith.addf %115, %133 : vector<40x128xf32>
    %cst_51 = arith.constant 0.000000e+00 : f32
    %135 = vector.broadcast %cst_51 : f32 to vector<40x128xf32>
    %136 = arith.select %2, %134, %135 : vector<40x128xi1>, vector<40x128xf32>
    %137 = vector.shape_cast %136 : vector<40x128xf32> to vector<5x8x128xf32>
    %cst_52 = arith.constant dense<0.000000e+00> : vector<8x128xf32>
    %138 = vector.multi_reduction <add>, %137, %cst_52 [0] : vector<5x8x128xf32> to vector<8x128xf32>
    %139 = arith.addf %105, %138 : vector<8x128xf32>
    %c4_i32 = arith.constant 4 : i32
    %140 = vector.shape_cast %139 : vector<8x128xf32> to vector<1x8x128xf32>
    %c0_53 = arith.constant 0 : index
    %c0_54 = arith.constant 0 : index
    %c0_55 = arith.constant 0 : index
    %141 = vector.load %arg3[%c0_53, %c0_54, %c0_55] : memref<1x8x128xf32, #tpu.memory_space<vmem>>, vector<1x8x128xf32>
    tpu.vector_store %arg3[%c0_53, %c0_54, %c0_55], %140 {strides = array<i32>} : memref<1x8x128xf32, #tpu.memory_space<vmem>>, vector<1x8x128xf32>,
    return
  }
  func.func @transform_0(%arg0: i32) -> (i32, i32) {
    %c0_i32 = arith.constant 0 : i32
    %c0_i32_0 = arith.constant 0 : i32
    return %arg0, %c0_i32 : i32, i32
  }
  func.func @transform_1(%arg0: i32) -> (i32, i32) {
    %c0_i32 = arith.constant 0 : i32
    %c0_i32_0 = arith.constant 0 : i32
    %c0_i32_1 = arith.constant 0 : i32
    return %c0_i32, %c0_i32_0 : i32, i32
  }
  func.func @transform_2(%arg0: i32) -> (i32, i32, i32) {
    %c0_i32 = arith.constant 0 : i32
    %c0_i32_0 = arith.constant 0 : i32
    %c0_i32_1 = arith.constant 0 : i32
    return %arg0, %c0_i32, %c0_i32_0 : i32, i32, i32
  }
}

</mosaic_0001>

<llo_original>
// kernel: _yolo_loss_impl.3
$region0: #{_yolo_loss_impl.3}
  #allocation0 [shape = 'u32[]', space=smem, size = 0x4, offset = 0x4, fixed_abs, tag = 'smem constant byte address 0x4 - core index']
  #allocation1 [shape = 'u32[144,128]{1,0:T(1,128)}', space=vmem, size = 0x12000, scoped, tag = 'internal scratch']
  %s0 = inlined_call_operand.vmem [shape: f32[160,128], index: 0, kind: input, shape index: {}]
  %s1 = inlined_call_operand.vmem [shape: f32[40,128], index: 1, kind: input, shape index: {}]
  %s2 = inlined_call_operand.vmem [shape: f32[1,8,128], index: 2, kind: output, shape index: {}]
  %s3 = sld [smem:[#allocation0]]
  $region18: #{_yolo_loss_impl.3} parent=0
    _
  %s5 = ssub.s32 1, %s3
  %s6 = scalar_select 0, %s5, %s3
  // Predicated region
  $region2: #{_yolo_loss_impl.3} parent=0 // pred_check
    _
  $region3: #{_yolo_loss_impl.3} parent=0 // pred_check_branch
    %8 = sbr.rel (0) target = $region5
  $region4: #{_yolo_loss_impl.3} parent=0 // pred_region
    _
  $region5: #{_yolo_loss_impl.3} parent=0 // pred_fallthru
    _
  // Predicated region
  $region6: #{_yolo_loss_impl.3} parent=0 // pred_check
    _
  $region7: #{_yolo_loss_impl.3} parent=0 // pred_check_branch
    %10 = sbr.rel (0) target = $region9
  $region8: #{_yolo_loss_impl.3} parent=0 // pred_region
    _
  $region9: #{_yolo_loss_impl.3} parent=0 // pred_fallthru
    _
  %v11 = vld [vmem:[%s1] sm:$0xff]
  %v12 = vld [vmem:[%s1 + $0x8] sm:$0xff]
  %v13 = vld [vmem:[%s1 + $0x10] sm:$0xff]
  %v14 = vld [vmem:[%s1 + $0x18] sm:$0xff]
  %v15 = vld [vmem:[%s1 + $0x20] sm:$0xff]
  %vm16 = vcmp.gt.f32.partialorder %v11, 0.5
  %vm17 = vcmp.gt.f32.partialorder %v12, 0.5
  %vm18 = vcmp.gt.f32.partialorder %v13, 0.5
  %vm19 = vcmp.gt.f32.partialorder %v14, 0.5
  %vm20 = vcmp.gt.f32.partialorder %v15, 0.5
  %v21 = vld [vmem:[%s0] sm:$0xff]
  %v22 = vld [vmem:[%s0 + $0x8] sm:$0xff]
  %v23 = vld [vmem:[%s0 + $0x10] sm:$0xff]
  %v24 = vld [vmem:[%s0 + $0x18] sm:$0xff]
  %v25 = vld [vmem:[%s0 + $0x20] sm:$0xff]
  %v26 = vsub.f32 0.0, %v21
  %v27 = vsub.f32 0.0, %v22
  %v28 = vsub.f32 0.0, %v23
  %v29 = vsub.f32 0.0, %v24
  %v30 = vsub.f32 0.0, %v25
  %v31 = vmul.f32 %v26, 1.442695
  %v32 = vpow.pop %v31
  %v33 = vmul.f32 %v27, 1.442695
  %v34 = vpow.pop %v33
  %v35 = vmul.f32 %v28, 1.442695
  %v36 = vpow.pop %v35
  %v37 = vmul.f32 %v29, 1.442695
  %v38 = vpow.pop %v37
  %v39 = vmul.f32 %v30, 1.442695
  %v40 = vpow.pop %v39
  %v41 = vadd.f32 %v32, 1.0
  %v42 = vadd.f32 %v34, 1.0
  %v43 = vadd.f32 %v36, 1.0
  %v44 = vadd.f32 %v38, 1.0
  %v45 = vadd.f32 %v40, 1.0
  %v46 = vrcp.pop %v41
  %v47 = vrcp.pop %v42
  %v48 = vrcp.pop %v43
  %v49 = vrcp.pop %v44
  %v50 = vrcp.pop %v45
  %v51 = vsub.f32 %v46, 0.5
  %v52 = vsub.f32 %v47, 0.5
  %v53 = vsub.f32 %v48, 0.5
  %v54 = vsub.f32 %v49, 0.5
  %v55 = vsub.f32 %v50, 0.5
  %v56 = vmul.f32 %v51, 0.000872967
  %v57 = vmul.f32 %v52, 0.000872967
  %v58 = vmul.f32 %v53, 0.000872967
  %v59 = vmul.f32 %v54, 0.000872967
  %v60 = vmul.f32 %v55, 0.000872967
  %v61 = vadd.f32 %v56, -0.004014866
  %v62 = vadd.f32 %v57, -0.004014866
  %v63 = vadd.f32 %v58, -0.004014866
  %v64 = vadd.f32 %v59, -0.004014866
  %v65 = vadd.f32 %v60, -0.004014866
  %v66 = vmul.f32 %v51, %v61
  %v67 = vmul.f32 %v52, %v62
  %v68 = vmul.f32 %v53, %v63
  %v69 = vmul.f32 %v54, %v64
  %v70 = vmul.f32 %v55, %v65
  %v71 = vadd.f32 %v66, -0.0095928
  %v72 = vadd.f32 %v67, -0.0095928
  %v73 = vadd.f32 %v68, -0.0095928
  %v74 = vadd.f32 %v69, -0.0095928
  %v75 = vadd.f32 %v70, -0.0095928
  %v76 = vmul.f32 %v51, %v71
  %v77 = vmul.f32 %v52, %v72
  %v78 = vmul.f32 %v53, %v73
  %v79 = vmul.f32 %v54, %v74
  %v80 = vmul.f32 %v55, %v75
  %v81 = vadd.f32 %v76, 0.11750186
  %v82 = vadd.f32 %v77, 0.11750186
  %v83 = vadd.f32 %v78, 0.11750186
  %v84 = vadd.f32 %v79, 0.11750186
  %v85 = vadd.f32 %v80, 0.11750186
  %v86 = vmul.f32 %v51, %v81
  %v87 = vmul.f32 %v52, %v82
  %v88 = vmul.f32 %v53, %v83
  %v89 = vmul.f32 %v54, %v84
  %v90 = vmul.f32 %v55, %v85
  %v91 = vadd.f32 %v86, -0.37754068
  %v92 = vadd.f32 %v87, -0.37754068
  %v93 = vadd.f32 %v88, -0.37754068
  %v94 = vadd.f32 %v89, -0.37754068
  %v95 = vadd.f32 %v90, -0.37754068
  %v96 = vmul.f32 %v51, %v91
  %v97 = vmul.f32 %v52, %v92
  %v98 = vmul.f32 %v53, %v93
  %v99 = vmul.f32 %v54, %v94
  %v100 = vmul.f32 %v55, %v95
  %v101 = vadd.f32 %v96, 0.474077
  %v102 = vadd.f32 %v97, 0.474077
  %v103 = vadd.f32 %v98, 0.474077
  %v104 = vadd.f32 %v99, 0.474077
  %v105 = vadd.f32 %v100, 0.474077
  %v106 = vadd.f32 %v46, %v101
  %v107 = vadd.f32 %v47, %v102
  %v108 = vadd.f32 %v48, %v103
  %v109 = vadd.f32 %v49, %v104
  %v110 = vadd.f32 %v50, %v105
  %v111 = vsel %vm16, %v106, 0.0
  %v112 = vsel %vm17, %v107, 0.0
  %v113 = vsel %vm18, %v108, 0.0
  %v114 = vsel %vm19, %v109, 0.0
  %v115 = vsel %vm20, %v110, 0.0
  %v116 = vadd.f32 %v111, %v112
  %v117 = vadd.f32 %v116, %v113
  %v118 = vadd.f32 %v117, %v114
  %v119 = vadd.f32 %v118, %v115
  %v120 = vadd.f32 %v119, 0.0
  %s121 = scalar_lea.vmem %s0, 40
  %v122 = vld [vmem:[%s121] sm:$0xff]
  %v123 = vld [vmem:[%s121 + $0x8] sm:$0xff]
  %v124 = vld [vmem:[%s121 + $0x10] sm:$0xff]
  %v125 = vld [vmem:[%s121 + $0x18] sm:$0xff]
  %v126 = vld [vmem:[%s121 + $0x20] sm:$0xff]
  %v127 = vsub.f32 0.0, %v122
  %v128 = vsub.f32 0.0, %v123
  %v129 = vsub.f32 0.0, %v124
  %v130 = vsub.f32 0.0, %v125
  %v131 = vsub.f32 0.0, %v126
  %v132 = vmul.f32 %v127, 1.442695
  %v133 = vpow.pop %v132
  %v134 = vmul.f32 %v128, 1.442695
  %v135 = vpow.pop %v134
  %v136 = vmul.f32 %v129, 1.442695
  %v137 = vpow.pop %v136
  %v138 = vmul.f32 %v130, 1.442695
  %v139 = vpow.pop %v138
  %v140 = vmul.f32 %v131, 1.442695
  %v141 = vpow.pop %v140
  %v142 = vadd.f32 %v133, 1.0
  %v143 = vadd.f32 %v135, 1.0
  %v144 = vadd.f32 %v137, 1.0
  %v145 = vadd.f32 %v139, 1.0
  %v146 = vadd.f32 %v141, 1.0
  %v147 = vrcp.pop %v142
  %v148 = vrcp.pop %v143
  %v149 = vrcp.pop %v144
  %v150 = vrcp.pop %v145
  %v151 = vrcp.pop %v146
  %v152 = vsub.f32 %v147, 0.5
  %v153 = vsub.f32 %v148, 0.5
  %v154 = vsub.f32 %v149, 0.5
  %v155 = vsub.f32 %v150, 0.5
  %v156 = vsub.f32 %v151, 0.5
  %v157 = vmul.f32 %v152, 0.000872967
  %v158 = vmul.f32 %v153, 0.000872967
  %v159 = vmul.f32 %v154, 0.000872967
  %v160 = vmul.f32 %v155, 0.000872967
  %v161 = vmul.f32 %v156, 0.000872967
  %v162 = vadd.f32 %v157, -0.004014866
  %v163 = vadd.f32 %v158, -0.004014866
  %v164 = vadd.f32 %v159, -0.004014866
  %v165 = vadd.f32 %v160, -0.004014866
  %v166 = vadd.f32 %v161, -0.004014866
  %v167 = vmul.f32 %v152, %v162
  %v168 = vmul.f32 %v153, %v163
  %v169 = vmul.f32 %v154, %v164
  %v170 = vmul.f32 %v155, %v165
  %v171 = vmul.f32 %v156, %v166
  %v172 = vadd.f32 %v167, -0.0095928
  %v173 = vadd.f32 %v168, -0.0095928
  %v174 = vadd.f32 %v169, -0.0095928
  %v175 = vadd.f32 %v170, -0.0095928
  %v176 = vadd.f32 %v171, -0.0095928
  %v177 = vmul.f32 %v152, %v172
  %v178 = vmul.f32 %v153, %v173
  %v179 = vmul.f32 %v154, %v174
  %v180 = vmul.f32 %v155, %v175
  %v181 = vmul.f32 %v156, %v176
  %v182 = vadd.f32 %v177, 0.11750186
  %v183 = vadd.f32 %v178, 0.11750186
  %v184 = vadd.f32 %v179, 0.11750186
  %v185 = vadd.f32 %v180, 0.11750186
  %v186 = vadd.f32 %v181, 0.11750186
  %v187 = vmul.f32 %v152, %v182
  %v188 = vmul.f32 %v153, %v183
  %v189 = vmul.f32 %v154, %v184
  %v190 = vmul.f32 %v155, %v185
  %v191 = vmul.f32 %v156, %v186
  %v192 = vadd.f32 %v187, -0.37754068
  %v193 = vadd.f32 %v188, -0.37754068
  %v194 = vadd.f32 %v189, -0.37754068
  %v195 = vadd.f32 %v190, -0.37754068
  %v196 = vadd.f32 %v191, -0.37754068
  %v197 = vmul.f32 %v152, %v192
  %v198 = vmul.f32 %v153, %v193
  %v199 = vmul.f32 %v154, %v194
  %v200 = vmul.f32 %v155, %v195
  %v201 = vmul.f32 %v156, %v196
  %v202 = vadd.f32 %v197, 0.474077
  %v203 = vadd.f32 %v198, 0.474077
  %v204 = vadd.f32 %v199, 0.474077
  %v205 = vadd.f32 %v200, 0.474077
  %v206 = vadd.f32 %v201, 0.474077
  %v207 = vadd.f32 %v147, %v202
  %v208 = vadd.f32 %v148, %v203
  %v209 = vadd.f32 %v149, %v204
  %v210 = vadd.f32 %v150, %v205
  %v211 = vadd.f32 %v151, %v206
  %v212 = vsel %vm16, %v207, 0.0
  %v213 = vsel %vm17, %v208, 0.0
  %v214 = vsel %vm18, %v209, 0.0
  %v215 = vsel %vm19, %v210, 0.0
  %v216 = vsel %vm20, %v211, 0.0
  %v217 = vadd.f32 %v212, %v213
  %v218 = vadd.f32 %v217, %v214
  %v219 = vadd.f32 %v218, %v215
  %v220 = vadd.f32 %v219, %v216
  %v221 = vadd.f32 %v120, %v220
  %s222 = scalar_lea.vmem %s0, 80
  %v223 = vld [vmem:[%s222] sm:$0xff]
  %v224 = vld [vmem:[%s222 + $0x8] sm:$0xff]
  %v225 = vld [vmem:[%s222 + $0x10] sm:$0xff]
  %v226 = vld [vmem:[%s222 + $0x18] sm:$0xff]
  %v227 = vld [vmem:[%s222 + $0x20] sm:$0xff]
  %v228 = vsub.f32 0.0, %v223
  %v229 = vsub.f32 0.0, %v224
  %v230 = vsub.f32 0.0, %v225
  %v231 = vsub.f32 0.0, %v226
  %v232 = vsub.f32 0.0, %v227
  %v233 = vmul.f32 %v228, 1.442695
  %v234 = vpow.pop %v233
  %v235 = vmul.f32 %v229, 1.442695
  %v236 = vpow.pop %v235
  %v237 = vmul.f32 %v230, 1.442695
  %v238 = vpow.pop %v237
  %v239 = vmul.f32 %v231, 1.442695
  %v240 = vpow.pop %v239
  %v241 = vmul.f32 %v232, 1.442695
  %v242 = vpow.pop %v241
  %v243 = vadd.f32 %v234, 1.0
  %v244 = vadd.f32 %v236, 1.0
  %v245 = vadd.f32 %v238, 1.0
  %v246 = vadd.f32 %v240, 1.0
  %v247 = vadd.f32 %v242, 1.0
  %v248 = vrcp.pop %v243
  %v249 = vrcp.pop %v244
  %v250 = vrcp.pop %v245
  %v251 = vrcp.pop %v246
  %v252 = vrcp.pop %v247
  %v253 = vsub.f32 %v248, 0.5
  %v254 = vsub.f32 %v249, 0.5
  %v255 = vsub.f32 %v250, 0.5
  %v256 = vsub.f32 %v251, 0.5
  %v257 = vsub.f32 %v252, 0.5
  %v258 = vmul.f32 %v253, 0.000872967
  %v259 = vmul.f32 %v254, 0.000872967
  %v260 = vmul.f32 %v255, 0.000872967
  %v261 = vmul.f32 %v256, 0.000872967
  %v262 = vmul.f32 %v257, 0.000872967
  %v263 = vadd.f32 %v258, -0.004014866
  %v264 = vadd.f32 %v259, -0.004014866
  %v265 = vadd.f32 %v260, -0.004014866
  %v266 = vadd.f32 %v261, -0.004014866
  %v267 = vadd.f32 %v262, -0.004014866
  %v268 = vmul.f32 %v253, %v263
  %v269 = vmul.f32 %v254, %v264
  %v270 = vmul.f32 %v255, %v265
  %v271 = vmul.f32 %v256, %v266
  %v272 = vmul.f32 %v257, %v267
  %v273 = vadd.f32 %v268, -0.0095928
  %v274 = vadd.f32 %v269, -0.0095928
  %v275 = vadd.f32 %v270, -0.0095928
  %v276 = vadd.f32 %v271, -0.0095928
  %v277 = vadd.f32 %v272, -0.0095928
  %v278 = vmul.f32 %v253, %v273
  %v279 = vmul.f32 %v254, %v274
  %v280 = vmul.f32 %v255, %v275
  %v281 = vmul.f32 %v256, %v276
  %v282 = vmul.f32 %v257, %v277
  %v283 = vadd.f32 %v278, 0.11750186
  %v284 = vadd.f32 %v279, 0.11750186
  %v285 = vadd.f32 %v280, 0.11750186
  %v286 = vadd.f32 %v281, 0.11750186
  %v287 = vadd.f32 %v282, 0.11750186
  %v288 = vmul.f32 %v253, %v283
  %v289 = vmul.f32 %v254, %v284
  %v290 = vmul.f32 %v255, %v285
  %v291 = vmul.f32 %v256, %v286
  %v292 = vmul.f32 %v257, %v287
  %v293 = vadd.f32 %v288, -0.37754068
  %v294 = vadd.f32 %v289, -0.37754068
  %v295 = vadd.f32 %v290, -0.37754068
  %v296 = vadd.f32 %v291, -0.37754068
  %v297 = vadd.f32 %v292, -0.37754068
  %v298 = vmul.f32 %v253, %v293
  %v299 = vmul.f32 %v254, %v294
  %v300 = vmul.f32 %v255, %v295
  %v301 = vmul.f32 %v256, %v296
  %v302 = vmul.f32 %v257, %v297
  %v303 = vadd.f32 %v298, 0.474077
  %v304 = vadd.f32 %v299, 0.474077
  %v305 = vadd.f32 %v300, 0.474077
  %v306 = vadd.f32 %v301, 0.474077
  %v307 = vadd.f32 %v302, 0.474077
  %v308 = vadd.f32 %v248, %v303
  %v309 = vadd.f32 %v249, %v304
  %v310 = vadd.f32 %v250, %v305
  %v311 = vadd.f32 %v251, %v306
  %v312 = vadd.f32 %v252, %v307
  %v313 = vsel %vm16, %v308, 0.0
  %v314 = vsel %vm17, %v309, 0.0
  %v315 = vsel %vm18, %v310, 0.0
  %v316 = vsel %vm19, %v311, 0.0
  %v317 = vsel %vm20, %v312, 0.0
  %v318 = vadd.f32 %v313, %v314
  %v319 = vadd.f32 %v318, %v315
  %v320 = vadd.f32 %v319, %v316
  %v321 = vadd.f32 %v320, %v317
  %v322 = vadd.f32 %v221, %v321
  %s323 = scalar_lea.vmem %s0, 120
  %v324 = vld [vmem:[%s323] sm:$0xff]
  %v325 = vld [vmem:[%s323 + $0x8] sm:$0xff]
  %v326 = vld [vmem:[%s323 + $0x10] sm:$0xff]
  %v327 = vld [vmem:[%s323 + $0x18] sm:$0xff]
  %v328 = vld [vmem:[%s323 + $0x20] sm:$0xff]
  %v329 = vsub.f32 0.0, %v324
  %v330 = vsub.f32 0.0, %v325
  %v331 = vsub.f32 0.0, %v326
  %v332 = vsub.f32 0.0, %v327
  %v333 = vsub.f32 0.0, %v328
  %v334 = vmul.f32 %v329, 1.442695
  %v335 = vpow.pop %v334
  %v336 = vmul.f32 %v330, 1.442695
  %v337 = vpow.pop %v336
  %v338 = vmul.f32 %v331, 1.442695
  %v339 = vpow.pop %v338
  %v340 = vmul.f32 %v332, 1.442695
  %v341 = vpow.pop %v340
  %v342 = vmul.f32 %v333, 1.442695
  %v343 = vpow.pop %v342
  %v344 = vadd.f32 %v335, 1.0
  %v345 = vadd.f32 %v337, 1.0
  %v346 = vadd.f32 %v339, 1.0
  %v347 = vadd.f32 %v341, 1.0
  %v348 = vadd.f32 %v343, 1.0
  %v349 = vrcp.pop %v344
  %v350 = vrcp.pop %v345
  %v351 = vrcp.pop %v346
  %v352 = vrcp.pop %v347
  %v353 = vrcp.pop %v348
  %v354 = vsub.f32 %v349, 0.5
  %v355 = vsub.f32 %v350, 0.5
  %v356 = vsub.f32 %v351, 0.5
  %v357 = vsub.f32 %v352, 0.5
  %v358 = vsub.f32 %v353, 0.5
  %v359 = vmul.f32 %v354, 0.000872967
  %v360 = vmul.f32 %v355, 0.000872967
  %v361 = vmul.f32 %v356, 0.000872967
  %v362 = vmul.f32 %v357, 0.000872967
  %v363 = vmul.f32 %v358, 0.000872967
  %v364 = vadd.f32 %v359, -0.004014866
  %v365 = vadd.f32 %v360, -0.004014866
  %v366 = vadd.f32 %v361, -0.004014866
  %v367 = vadd.f32 %v362, -0.004014866
  %v368 = vadd.f32 %v363, -0.004014866
  %v369 = vmul.f32 %v354, %v364
  %v370 = vmul.f32 %v355, %v365
  %v371 = vmul.f32 %v356, %v366
  %v372 = vmul.f32 %v357, %v367
  %v373 = vmul.f32 %v358, %v368
  %v374 = vadd.f32 %v369, -0.0095928
  %v375 = vadd.f32 %v370, -0.0095928
  %v376 = vadd.f32 %v371, -0.0095928
  %v377 = vadd.f32 %v372, -0.0095928
  %v378 = vadd.f32 %v373, -0.0095928
  %v379 = vmul.f32 %v354, %v374
  %v380 = vmul.f32 %v355, %v375
  %v381 = vmul.f32 %v356, %v376
  %v382 = vmul.f32 %v357, %v377
  %v383 = vmul.f32 %v358, %v378
  %v384 = vadd.f32 %v379, 0.11750186
  %v385 = vadd.f32 %v380, 0.11750186
  %v386 = vadd.f32 %v381, 0.11750186
  %v387 = vadd.f32 %v382, 0.11750186
  %v388 = vadd.f32 %v383, 0.11750186
  %v389 = vmul.f32 %v354, %v384
  %v390 = vmul.f32 %v355, %v385
  %v391 = vmul.f32 %v356, %v386
  %v392 = vmul.f32 %v357, %v387
  %v393 = vmul.f32 %v358, %v388
  %v394 = vadd.f32 %v389, -0.37754068
  %v395 = vadd.f32 %v390, -0.37754068
  %v396 = vadd.f32 %v391, -0.37754068
  %v397 = vadd.f32 %v392, -0.37754068
  %v398 = vadd.f32 %v393, -0.37754068
  %v399 = vmul.f32 %v354, %v394
  %v400 = vmul.f32 %v355, %v395
  %v401 = vmul.f32 %v356, %v396
  %v402 = vmul.f32 %v357, %v397
  %v403 = vmul.f32 %v358, %v398
  %v404 = vadd.f32 %v399, 0.474077
  %v405 = vadd.f32 %v400, 0.474077
  %v406 = vadd.f32 %v401, 0.474077
  %v407 = vadd.f32 %v402, 0.474077
  %v408 = vadd.f32 %v403, 0.474077
  %v409 = vadd.f32 %v349, %v404
  %v410 = vadd.f32 %v350, %v405
  %v411 = vadd.f32 %v351, %v406
  %v412 = vadd.f32 %v352, %v407
  %v413 = vadd.f32 %v353, %v408
  %v414 = vsel %vm16, %v409, 0.0
  %v415 = vsel %vm17, %v410, 0.0
  %v416 = vsel %vm18, %v411, 0.0
  %v417 = vsel %vm19, %v412, 0.0
  %v418 = vsel %vm20, %v413, 0.0
  %v419 = vadd.f32 %v414, %v415
  %v420 = vadd.f32 %v419, %v416
  %v421 = vadd.f32 %v420, %v417
  %v422 = vadd.f32 %v421, %v418
  %v423 = vadd.f32 %v322, %v422
  %424 = vst [vmem:[%s2] sm:$0xff] %v423
  // Predicated region
  $region10: #{_yolo_loss_impl.3} parent=0 // pred_check
    _
  $region11: #{_yolo_loss_impl.3} parent=0 // pred_check_branch
    %426 = sbr.rel (0) target = $region13
  $region12: #{_yolo_loss_impl.3} parent=0 // pred_region
    _
  $region13: #{_yolo_loss_impl.3} parent=0 // pred_fallthru
    _
  // Predicated region
  $region14: #{_yolo_loss_impl.3} parent=0 // pred_check
    _
  $region15: #{_yolo_loss_impl.3} parent=0 // pred_check_branch
    %428 = sbr.rel (0) target = $region17
  $region16: #{_yolo_loss_impl.3} parent=0 // pred_region
    _
  $region17: #{_yolo_loss_impl.3} parent=0 // pred_fallthru
    _

</llo_original>
